<compile_context>
chip_gen: v7x
topology: tpu7x:2x2x1
jax: 0.10.0
libtpu: 0.0.40
codegen_flags: <defaults>
</compile_context>

<pallas_src>
import functools

import numpy as np
import jax
import jax.numpy as jnp
from jax.experimental import pallas as pl
from jax.experimental.pallas import tpu as pltpu

NULL_VAL = 0.0                  # matches MaskedLoss(null_val=0.0) default
_MAX_LANES = 2048               # cap on lane-dense last dim of the flattened slab
_PASS1_TILE_BYTES = 8 << 20     # sum pass: only the input is pipelined (2 bufs)
_PASS2_TILE_BYTES = 6 << 20     # normalize pass: input + output pipelined (4 bufs)
_FASTPATH_BYTES = 16 << 20      # budget (input + mask temp + output) for fused path
_VMEM_LIMIT_BYTES = 48 << 20    # safe on v7x (64 MiB phys) and v5e/v6e (128 MiB)


def _valid_of(t, null_val):
    """Boolean validity mask, matching the torch branch on np.isnan(null_val)."""
    if np.isnan(null_val):
        return ~jnp.isnan(t)
    return t != jnp.asarray(null_val, dtype=t.dtype)


# ---------------------------------------------------------------------------
# Fused fast path: whole slab in VMEM, one read, one write, one dispatch.
# ---------------------------------------------------------------------------
def _fused_kernel(t_ref, out_ref, *, null_val, n_real):
    valid = _valid_of(t_ref[...], null_val)
    total = jnp.sum(valid.astype(jnp.float32))
    scale = jnp.where(total == 0.0, jnp.float32(0.0), jnp.float32(n_real) / total)
    out_ref[...] = jnp.where(valid, scale, jnp.float32(0.0))


# ---------------------------------------------------------------------------
# Kernel A: per-split sum of the validity mask.
# Grid = (nsplit, tiles_per_split); leading axis is "parallel" (megacore on v7x),
# inner axis is the sequential reduction. Per-lane partials live in an (8, lanes)
# VMEM scratch (pure VPU adds); one XLU reduce per split on the last inner step.
# Odd tile counts: split 1's last step re-reads the final tile (clamped
# index_map) and its contribution is masked out with pl.when.
# ---------------------------------------------------------------------------
def _mask_sum_kernel(t_ref, psum_ref, acc_ref, *, null_val, tiles_per_split,
                     n_tiles):
    c = pl.program_id(0)
    j = pl.program_id(1)

    @pl.when(j == 0)
    def _():
        acc_ref[...] = jnp.zeros_like(acc_ref)

    @pl.when(c * tiles_per_split + j < n_tiles)
    def _():
        m = _valid_of(t_ref[...], null_val).astype(jnp.float32)
        acc_ref[...] += jnp.sum(
            m.reshape(-1, acc_ref.shape[0], acc_ref.shape[1]), axis=0)

    @pl.when(j == pl.num_programs(1) - 1)
    def _():
        psum_ref[0, 0, 0] = jnp.sum(acc_ref[...])      # one XLU reduce per split


# ---------------------------------------------------------------------------
# Kernel B: elementwise normalize.  out = where(valid, scale, 0) with
# scale = n_real / sum (or 0 when sum == 0, reproducing the 0/0 -> 0 guard).
# The per-split sums arrive through SMEM (scalar reads only).
# ---------------------------------------------------------------------------
def _normalize_kernel(psum_ref, t_ref, out_ref, *, null_val, n_real, nsplit):
    total = psum_ref[0]
    for s in range(1, nsplit):                          # static, nsplit <= 2
        total = total + psum_ref[s]
    scale = jnp.where(total == 0.0, jnp.float32(0.0), jnp.float32(n_real) / total)
    out_ref[...] = jnp.where(_valid_of(t_ref[...], null_val),
                             scale, jnp.float32(0.0))


def _pick_lanes(n_pad, max_lanes):
    lanes = 128
    while (lanes * 2 <= max_lanes
           and n_pad % (lanes * 2) == 0
           and (n_pad // (lanes * 2)) % 8 == 0):
        lanes *= 2
    return lanes


def _pick_tile_rows(rows, lanes, itemsize, tile_bytes):
    target = max(8, (tile_bytes // (lanes * itemsize)) // 8 * 8)
    if rows <= target:
        return rows                                     # single block (full dim)
    tr = target
    while rows % tr != 0:                               # terminates at 8
        tr -= 8
    return tr


def compute_mask(targets: jax.Array, null_val: float = NULL_VAL, *,
                 max_lanes: int = _MAX_LANES,
                 pass1_tile_bytes: int = _PASS1_TILE_BYTES,
                 pass2_tile_bytes: int = _PASS2_TILE_BYTES,
                 fastpath_bytes: int = _FASTPATH_BYTES) -> jax.Array:
    """Pallas equivalent of MaskedLoss.compute_mask. Returns float32, same shape."""
    orig_shape = targets.shape
    n_real = int(np.prod(orig_shape))
    in_itemsize = int(np.dtype(targets.dtype).itemsize)

    # Flatten and pad to a lane-dense (rows, lanes) slab. Padded elements are
    # "null" (== null_val, or NaN for the NaN branch) so they contribute 0 to
    # the mask sum and get written as 0, then are sliced off the output.
    flat = targets.reshape(-1)
    n_pad = -(-n_real // 1024) * 1024
    if n_pad != n_real:
        pad_val = float("nan") if np.isnan(null_val) else null_val
        flat = jnp.concatenate(
            [flat, jnp.full((n_pad - n_real,), pad_val, dtype=flat.dtype)])

    lanes = _pick_lanes(n_pad, max_lanes)
    rows = n_pad // lanes                               # multiple of 8
    t2d = flat.reshape(rows, lanes)

    def _unflatten(out2d):
        if n_pad != n_real:
            return out2d.reshape(-1)[:n_real].reshape(orig_shape)
        return out2d.reshape(orig_shape)

    # ---- fused single-call fast path (slab + mask + output fit in VMEM) ----
    if n_pad * (in_itemsize + 8) <= fastpath_bytes:
        out2d = pl.pallas_call(
            functools.partial(_fused_kernel, null_val=null_val, n_real=n_real),
            out_shape=jax.ShapeDtypeStruct((rows, lanes), jnp.float32),
            in_specs=[pl.BlockSpec(memory_space=pltpu.MemorySpace.VMEM)],
            out_specs=pl.BlockSpec(memory_space=pltpu.MemorySpace.VMEM),
            compiler_params=pltpu.CompilerParams(
                vmem_limit_bytes=_VMEM_LIMIT_BYTES),
            cost_estimate=pl.CostEstimate(
                flops=3 * n_pad, transcendentals=0,
                bytes_accessed=n_pad * (in_itemsize + 4)),
        )(t2d)
        return _unflatten(out2d)

    # ---- pass 1: per-split sum of the validity mask ----
    tr1 = _pick_tile_rows(rows, lanes, in_itemsize, pass1_tile_bytes)
    n_tiles1 = rows // tr1
    nsplit = 2 if n_tiles1 >= 2 else 1
    tps = -(-n_tiles1 // nsplit)                        # ceil div

    psum = pl.pallas_call(
        functools.partial(_mask_sum_kernel, null_val=null_val,
                          tiles_per_split=tps, n_tiles=n_tiles1),
        out_shape=jax.ShapeDtypeStruct((nsplit, 1, 1), jnp.float32),
        grid=(nsplit, tps),
        in_specs=[pl.BlockSpec(
            (tr1, lanes),
            lambda c, j: (jnp.minimum(c * tps + j, n_tiles1 - 1), 0))],
        out_specs=pl.BlockSpec((1, 1, 1), lambda c, j: (c, 0, 0)),
        scratch_shapes=[pltpu.VMEM((8, lanes), jnp.float32)],
        compiler_params=pltpu.CompilerParams(
            dimension_semantics=("parallel", "arbitrary"),
            vmem_limit_bytes=_VMEM_LIMIT_BYTES),
        cost_estimate=pl.CostEstimate(
            flops=2 * n_pad, transcendentals=0,
            bytes_accessed=n_pad * in_itemsize),
    )(t2d)

    # ---- pass 2: where(valid, n_real / sum, 0), sum==0 -> 0 semantics ----
    # Note: sum carried in f32; for >~16M valid elements f32 rounding can drift
    # ~1 ulp from the torch reference (which also accumulates in f32).
    tr2 = _pick_tile_rows(rows, lanes, max(in_itemsize, 4), pass2_tile_bytes)
    n_tiles2 = rows // tr2

    out2d = pl.pallas_call(
        functools.partial(_normalize_kernel, null_val=null_val,
                          n_real=n_real, nsplit=nsplit),
        out_shape=jax.ShapeDtypeStruct((rows, lanes), jnp.float32),
        grid=(n_tiles2,),
        in_specs=[pl.BlockSpec(memory_space=pltpu.MemorySpace.SMEM),
                  pl.BlockSpec((tr2, lanes), lambda i: (i, 0))],
        out_specs=pl.BlockSpec((tr2, lanes), lambda i: (i, 0)),
        compiler_params=pltpu.CompilerParams(
            dimension_semantics=("parallel",),
            vmem_limit_bytes=_VMEM_LIMIT_BYTES),
        cost_estimate=pl.CostEstimate(
            flops=2 * n_pad, transcendentals=0,
            bytes_accessed=n_pad * (in_itemsize + 4)),
    )(psum.reshape(nsplit), t2d)

    return _unflatten(out2d)


def _reference_compute_mask(targets, null_val=NULL_VAL):
    """Pure-JAX reference mirroring the torch code."""
    if np.isnan(null_val):
        mask = ~jnp.isnan(targets)
    else:
        mask = targets != null_val
    mask = mask.astype(jnp.float32)
    mask = mask / jnp.mean(mask)
    return jnp.where(jnp.isnan(mask), 0.0, mask)


if __name__ == "__main__":
    key = jax.random.PRNGKey(0)
    k1, k2, k3, k4 = jax.random.split(key, 4)

    # Case 1: default (fused fast path), NCHW (2,4,16,16), null_val = 0.0
    B, C, H, W = 2, 4, 16, 16
    targets = jax.random.normal(k1, (B, C, H, W), dtype=jnp.float32)
    drop = jax.random.uniform(k2, (B, C, H, W)) < 0.3
    targets = jnp.where(drop, jnp.float32(NULL_VAL), targets)
    mask = compute_mask(targets, NULL_VAL)
    jax.block_until_ready(mask)
    np.testing.assert_allclose(
        np.asarray(mask), np.asarray(_reference_compute_mask(targets, NULL_VAL)),
        rtol=1e-6, atol=1e-6)

    # Case 2: force the two-pass path with an even tile count (2-way split).
    t2 = jax.random.normal(k3, (2, 8, 32, 128), dtype=jnp.float32)
    t2 = jnp.where(jax.random.uniform(k4, t2.shape) < 0.5, jnp.float32(0.0), t2)
    m2 = compute_mask(t2, 0.0, max_lanes=256, fastpath_bytes=0,
                      pass1_tile_bytes=16 * 1024, pass2_tile_bytes=16 * 1024)
    jax.block_until_ready(m2)
    np.testing.assert_allclose(
        np.asarray(m2), np.asarray(_reference_compute_mask(t2, 0.0)),
        rtol=1e-6, atol=1e-6)

    # Case 3: force the two-pass path with an ODD tile count (3 tiles) so the
    # clamped-index / pl.when-guarded duplicate tile path is exercised.
    t3 = jax.random.normal(k2, (3, 8, 32, 128), dtype=jnp.float32)
    t3 = jnp.where(jax.random.uniform(k1, t3.shape) < 0.4, jnp.float32(0.0), t3)
    m3 = compute_mask(t3, 0.0, max_lanes=256, fastpath_bytes=0,
                      pass1_tile_bytes=128 * 1024, pass2_tile_bytes=64 * 1024)
    jax.block_until_ready(m3)
    np.testing.assert_allclose(
        np.asarray(m3), np.asarray(_reference_compute_mask(t3, 0.0)),
        rtol=1e-6, atol=1e-6)

    # Case 4: all-null input -> mean == 0 -> 0/0 case must give all zeros.
    t4 = jnp.zeros((2, 4, 16, 16), jnp.float32)
    m4 = compute_mask(t4, 0.0)
    jax.block_until_ready(m4)
    np.testing.assert_allclose(np.asarray(m4), np.zeros((2, 4, 16, 16), np.float32))

    # Case 5: NaN null_val branch.
    t5 = jax.random.normal(k1, (2, 4, 16, 16), dtype=jnp.float32)
    t5 = jnp.where(jax.random.uniform(k2, t5.shape) < 0.3, jnp.float32(jnp.nan), t5)
    m5 = compute_mask(t5, float("nan"))
    jax.block_until_ready(m5)
    np.testing.assert_allclose(
        np.asarray(m5), np.asarray(_reference_compute_mask(t5, float("nan"))),
        rtol=1e-6, atol=1e-6)

    # Case 6: shape not divisible by 8*128 -> padding path.
    t6 = jax.random.normal(k3, (3, 5, 7), dtype=jnp.float32)
    t6 = jnp.where(jax.random.uniform(k4, t6.shape) < 0.3, jnp.float32(0.0), t6)
    m6 = compute_mask(t6, 0.0)
    jax.block_until_ready(m6)
    np.testing.assert_allclose(
        np.asarray(m6), np.asarray(_reference_compute_mask(t6, 0.0)),
        rtol=1e-6, atol=1e-6)

    print("KERNEL_OK")
</pallas_src>

<mosaic_0001>
module attributes {stable_mosaic.version = 11 : i64} {
  func.func @_fused_kernel(%arg0: memref<8x256xf32, #tpu.memory_space<vmem>>, %arg1: memref<8x256xf32, #tpu.memory_space<vmem>>) attributes {dimension_semantics = [], scalar_prefetch = 0 : i64, scratch_operands = 0 : i64, tpu.core_type = #tpu.core_type<tc>} {
    %c0 = arith.constant 0 : index
    %c0_0 = arith.constant 0 : index
    %0 = vector.load %arg0[%c0, %c0_0] : memref<8x256xf32, #tpu.memory_space<vmem>>, vector<8x256xf32>
    %cst = arith.constant 0.000000e+00 : f32
    %1 = vector.broadcast %cst : f32 to vector<8x256xf32>
    %2 = arith.cmpf one, %0, %1 : vector<8x256xf32>
    %3 = arith.extui %2 : vector<8x256xi1> to vector<8x256xi32>
    %4 = arith.sitofp %3 : vector<8x256xi32> to vector<8x256xf32>
    %5 = vector.shape_cast %4 : vector<8x256xf32> to vector<1x8x256xf32>
    %cst_1 = arith.constant dense<0.000000e+00> : vector<1xf32>
    %6 = vector.multi_reduction <add>, %5, %cst_1 [1, 2] : vector<1x8x256xf32> to vector<1xf32>
    %7 = vector.shape_cast %6 : vector<1xf32> to vector<1x1x1xf32>
    %8 = vector.extract %7[0, 0, 0] : f32 from vector<1x1x1xf32>
    %cst_2 = arith.constant 0.000000e+00 : f32
    %9 = arith.cmpf oeq, %8, %cst_2 : f32
    %cst_3 = arith.constant 2.048000e+03 : f32
    %10 = arith.divf %cst_3, %8 : f32
    %cst_4 = arith.constant 0.000000e+00 : f32
    %11 = arith.select %9, %cst_4, %10 : f32
    %cst_5 = arith.constant 0.000000e+00 : f32
    %12 = vector.broadcast %11 : f32 to vector<8x256xf32>
    %13 = vector.broadcast %cst_5 : f32 to vector<8x256xf32>
    %14 = arith.select %2, %12, %13 : vector<8x256xi1>, vector<8x256xf32>
    %c0_6 = arith.constant 0 : index
    %c0_7 = arith.constant 0 : index
    %15 = vector.load %arg1[%c0_6, %c0_7] : memref<8x256xf32, #tpu.memory_space<vmem>>, vector<8x256xf32>
    tpu.vector_store %arg1[%c0_6, %c0_7], %14 {strides = array<i32>} : memref<8x256xf32, #tpu.memory_space<vmem>>, vector<8x256xf32>,
    return
  }
}

</mosaic_0001>

<llo_original>
// kernel: tpu_custom_call.1
$region0: #{tpu_custom_call.1}
  #allocation0 [shape = 'u32[]', space=smem, size = 0x4, offset = 0x4, fixed_abs, tag = 'smem constant byte address 0x4 - core index']
  #allocation1 [shape = 'u32[144,128]{1,0:T(1,128)}', space=vmem, size = 0x12000, scoped, tag = 'internal scratch']
  %s0 = inlined_call_operand.hbm [shape: f32[8,256], index: 0, kind: input, shape index: {}]
  %s1 = inlined_call_operand.hbm [shape: f32[8,256], index: 1, kind: output, shape index: {}]
  %s2 = sld [smem:[#allocation0]]
  $region18: #{tpu_custom_call.1} parent=0
    _
  %s4 = ssub.s32 1, %s2
  %s5 = scalar_select 0, %s4, %s2
  $region1: #{tpu_custom_call.1} parent=0
    #allocation2 [shape = 'u8[8192]{0}', space=vmem, size = 0x2000, scoped, tag = 'input window, operand 0, single buffered']
    #allocation3 [shape = 's32[1]{0}', space=sflag, size = 0x4, scoped, tag = 'scoped memory for tpu_custom_call.1']
    #allocation4 [shape = 's32[1]{0}', space=sflag, size = 0x4, scoped, tag = 'scoped memory for tpu_custom_call.1']
    #allocation5 [shape = 'u8[8192]{0}', space=vmem, size = 0x2000, scoped, tag = 'output window, operand 0, single buffered']
    %6 = vsyncpa [#allocation3], 0
    %7 = vsyncpa [#allocation4], 0
    // Predicated region
    $region2: #{tpu_custom_call.1} parent=1 // pred_check
      _
    $region3: #{tpu_custom_call.1} parent=1 // pred_check_branch
      %9 = sbr.rel (0) target = $region5
    $region4: #{tpu_custom_call.1} parent=1 // pred_region
      %s11 = ssub.s32 256, 256
      %12 = vsyncadd [#allocation3], %s11
      %s14 = sshll.u32 [#allocation2], 4
      %s15 = int_to_ptr.vmem [resolvable:$true] %s14
      %17 = dma.hbm_to_vmem [thread:$0]  %s0, 256, %s15, [#allocation3]
    $region5: #{tpu_custom_call.1} parent=1 // pred_fallthru
      _
    // Predicated region
    $region6: #{tpu_custom_call.1} parent=1 // pred_check
      _
    $region7: #{tpu_custom_call.1} parent=1 // pred_check_branch
      %19 = sbr.rel (0) target = $region9
    $region8: #{tpu_custom_call.1} parent=1 // pred_region
      %20 = dma.done [#allocation3], 256
    $region9: #{tpu_custom_call.1} parent=1 // pred_fallthru
      _
    %v21 = vld [vmem:[#allocation2] sm:$0xff]
    %v22 = vld [vmem:[#allocation2 + $0x8] sm:$0xff]
    %vm23 = vcmp.ne.f32.partialorder %v21, 0.0
    %vm24 = vcmp.ne.f32.partialorder %v22, 0.0
    %v25 = vsel %vm23, 1, 0
    %v26 = vsel %vm24, 1, 0
    %v27 = vcvt.s32.f32 %v25
    %v28 = vcvt.s32.f32 %v26
    %v29 = vadd.f32 %v27, %v28
    %30 = vadd.xlane.f32.xlu0 %v29
    %v31 = vpop.xlane.xlu0 %30
    %v32 = vrot.slane %v31, 4
    %v33 = vadd.f32 %v31, %v32
    %v34 = vrot.slane %v33, 2
    %v35 = vadd.f32 %v33, %v34
    %v36 = vrot.slane %v35, 1
    %v37 = vadd.f32 %v35, %v36
    %s38 = vtos %v37
    %p39 = scmp.eq.f32.partialorder %s38, 0.0
    %v40 = vstv %s38
    %v41 = vrcp.pop %v40
    %s42 = vtos %v41
    %s43 = smul.f32 2048.0, %s42
    %s44 = scalar_select %p39, 0.0, %s43
    %v45 = vstv %s44
    %v46 = vsel %vm23, %v45, 0.0
    %v47 = vsel %vm24, %v45, 0.0
    %48 = vst [vmem:[#allocation5] sm:$0xff] %v46
    %49 = vst [vmem:[#allocation5 + $0x8] sm:$0xff] %v47
    // Predicated region
    $region10: #{tpu_custom_call.1} parent=1 // pred_check
      _
    $region11: #{tpu_custom_call.1} parent=1 // pred_check_branch
      %51 = sbr.rel (0) target = $region13
    $region12: #{tpu_custom_call.1} parent=1 // pred_region
      %s53 = ssub.s32 256, 256
      %54 = vsyncadd [#allocation4], %s53
      %s56 = sshll.u32 [#allocation5], 4
      %s57 = int_to_ptr.vmem [resolvable:$true] %s56
      %59 = dma.vmem_to_hbm [thread:$0]  %s57, 256, %s1, [#allocation4]
    $region13: #{tpu_custom_call.1} parent=1 // pred_fallthru
      _
    // Predicated region
    $region14: #{tpu_custom_call.1} parent=1 // pred_check
      _
    $region15: #{tpu_custom_call.1} parent=1 // pred_check_branch
      %61 = sbr.rel (0) target = $region17
    $region16: #{tpu_custom_call.1} parent=1 // pred_region
      %62 = dma.done [#allocation4], 256
    $region17: #{tpu_custom_call.1} parent=1 // pred_fallthru
      _
    %63 = vsyncpa [#allocation3], 1
    %64 = vsyncpa [#allocation4], 1

</llo_original>
